<compile_context>
chip_gen: v5e
topology: v5e:2x2
jax: 0.10.0
libtpu: 0.0.40
codegen_flags: <defaults>
</compile_context>

<pallas_src>
import functools

import jax
import jax.numpy as jnp
from jax.experimental import pallas as pl
from jax.experimental.pallas import tpu as pltpu


def _distill_kl_kernel(ys_ref, yt_ref, o_ref, *, inv_t: float, scale: float):
    # One (TB, C) row-block per grid step; the class (softmax) axis is last so
    # it maps onto the 128-lane axis, matching PyTorch's dim=1 softmax.
    ys = ys_ref[...].astype(jnp.float32) * inv_t
    yt = yt_ref[...].astype(jnp.float32) * inv_t

    ys_shift = ys - jnp.max(ys, axis=1, keepdims=True)
    yt_shift = yt - jnp.max(yt, axis=1, keepdims=True)

    denom_s = jnp.sum(jnp.exp(ys_shift), axis=1, keepdims=True)    # (TB, 1)
    et = jnp.exp(yt_shift)
    denom_t = jnp.sum(et, axis=1, keepdims=True)                   # (TB, 1)
    pt = et * pl.reciprocal(denom_t, approx=False)

    # Simplified per-row KL:
    #   sum_c pt * (log pt - log ps)
    # = sum_c pt * (yt_shift - ys_shift) + log(denom_s) - log(denom_t)
    # (uses sum_c pt == 1; no full-size log temporaries, no where()).
    row_kl = (jnp.sum(pt * (yt_shift - ys_shift), axis=1, keepdims=True)
              + jnp.log(denom_s) - jnp.log(denom_t))               # (TB, 1)

    # Lane-dense (1, 128) unmasked store of this block's scaled partial sum;
    # the wrapper reads lane 0 of each block only.
    partial = jnp.sum(row_kl) * scale
    o_ref[...] = jnp.full(o_ref.shape, partial, dtype=jnp.float32)


def _pick_tile_rows(batch, n_cls, itemsize, vmem_budget_bytes):
    # 2 inputs x 2 pipeline buffers x TB x C x itemsize must fit the budget
    # (budget kept well under v7x's 64 MiB physical VMEM).
    per_row = 4 * n_cls * itemsize
    tb = max(1, vmem_budget_bytes // max(per_row, 1))
    tb = max(8, (tb // 8) * 8)              # multiple of 8 sublanes
    tb = min(tb, 1024)                      # diminishing returns past ~512
    padded_b = max(8, ((batch + 7) // 8) * 8)
    return min(tb, padded_b)


def distill_kl(y_s, y_t, T, *, tile_rows=None,
               vmem_budget_bytes=32 * 1024 * 1024):
    """Pallas DistillKL.forward.  y_s, y_t: (B, C) logits (f32 or bf16)."""
    assert y_s.shape == y_t.shape and y_s.ndim == 2
    B, C = y_s.shape
    itemsize = jnp.dtype(y_s.dtype).itemsize

    tb = tile_rows if tile_rows is not None else _pick_tile_rows(
        B, C, itemsize, vmem_budget_bytes)
    tb = max(8, (tb // 8) * 8)

    # Pad the batch to a multiple of the row tile.  Zero-logit padding rows
    # give identical uniform p_s and p_t and contribute exactly 0 to the KL.
    B_pad = ((B + tb - 1) // tb) * tb
    if B_pad != B:
        pad = ((0, B_pad - B), (0, 0))
        y_s = jnp.pad(y_s, pad)
        y_t = jnp.pad(y_t, pad)
    num_blocks = B_pad // tb

    # TODO(synk): for vocab-scale C (128K+) where a single (TB, C) f32 block no
    # longer fits VMEM, add an inner class-axis grid with online-softmax state.

    kernel = functools.partial(
        _distill_kl_kernel,
        inv_t=1.0 / float(T),
        scale=float(T) * float(T) / float(B),   # divide by the ORIGINAL batch
    )

    needed_vmem = 4 * tb * C * itemsize + (2 << 20)
    vmem_limit = int(min(96 << 20, max(32 << 20, needed_vmem)))

    cost = pl.CostEstimate(
        flops=10 * B_pad * C,
        transcendentals=2 * B_pad * C,
        bytes_accessed=2 * B_pad * C * itemsize + num_blocks * 128 * 4,
    )

    partials = pl.pallas_call(
        kernel,
        out_shape=jax.ShapeDtypeStruct((num_blocks, 128), jnp.float32),
        grid=(num_blocks,),
        in_specs=[
            pl.BlockSpec((tb, C), lambda i: (i, 0)),
            pl.BlockSpec((tb, C), lambda i: (i, 0)),
        ],
        out_specs=pl.BlockSpec((1, 128), lambda i: (i, 0)),
        compiler_params=pltpu.CompilerParams(
            dimension_semantics=("parallel",),
            vmem_limit_bytes=vmem_limit,
        ),
        cost_estimate=cost,
    )(y_s, y_t)

    # Each block wrote its scaled partial sum across all 128 lanes; the final
    # loss is the sum of lane 0 over blocks.
    return jnp.sum(partials[:, 0])


def _reference(y_s, y_t, T):
    ps = jax.nn.log_softmax(y_s.astype(jnp.float32) / T, axis=1)
    pt = jax.nn.softmax(y_t.astype(jnp.float32) / T, axis=1)
    kl = jnp.sum(pt * (jnp.log(pt) - ps))
    return kl * T ** 2 / y_s.shape[0]


if __name__ == "__main__":
    key = jax.random.PRNGKey(0)
    T = 4.0
    k1, k2, k3, k4 = jax.random.split(key, 4)

    # Case 1: tiny shape matching the module's typical toy test (single block).
    B, C = 8, 32
    y_s = jax.random.normal(k1, (B, C), dtype=jnp.float32)
    y_t = jax.random.normal(k2, (B, C), dtype=jnp.float32)
    loss = jax.block_until_ready(distill_kl(y_s, y_t, T))
    ref = _reference(y_s, y_t, T)
    assert jnp.allclose(loss, ref, rtol=1e-5, atol=1e-5), (loss, ref)

    # Case 2: exercises the gridded/padded path (batch not a tile multiple,
    # multi-step "parallel" grid) with bf16 inputs to halve HBM traffic.
    B2, C2 = 20, 256
    y_s2 = jax.random.normal(k3, (B2, C2), dtype=jnp.float32).astype(jnp.bfloat16)
    y_t2 = jax.random.normal(k4, (B2, C2), dtype=jnp.float32).astype(jnp.bfloat16)
    loss2 = jax.block_until_ready(distill_kl(y_s2, y_t2, T, tile_rows=8))
    ref2 = _reference(y_s2, y_t2, T)
    assert jnp.allclose(loss2, ref2, rtol=1e-4, atol=1e-4), (loss2, ref2)

    print("KERNEL_OK")
</pallas_src>

<mosaic_0001>
module attributes {stable_mosaic.version = 11 : i64} {
  func.func @_distill_kl_kernel(%arg0: i32, %arg1: memref<8x32xf32, #tpu.memory_space<vmem>>, %arg2: memref<8x32xf32, #tpu.memory_space<vmem>>, %arg3: memref<1x128xf32, #tpu.memory_space<vmem>>) attributes {dimension_semantics = [#tpu.dimension_semantics<parallel>], iteration_bounds = array<i64: 1>, scalar_prefetch = 0 : i64, scratch_operands = 0 : i64, tpu.core_type = #tpu.core_type<tc>, window_params = [{transform_indices = @transform_0, window_bounds = array<i64: 8, 32>}, {transform_indices = @transform_1, window_bounds = array<i64: 8, 32>}, {transform_indices = @transform_2, window_bounds = array<i64: 1, 128>}]} {
    %c0 = arith.constant 0 : index
    %c0_0 = arith.constant 0 : index
    %0 = vector.load %arg1[%c0, %c0_0] : memref<8x32xf32, #tpu.memory_space<vmem>>, vector<8x32xf32>
    %cst = arith.constant 2.500000e-01 : f32
    %1 = vector.broadcast %cst : f32 to vector<8x32xf32>
    %2 = arith.mulf %0, %1 : vector<8x32xf32>
    %c0_1 = arith.constant 0 : index
    %c0_2 = arith.constant 0 : index
    %3 = vector.load %arg2[%c0_1, %c0_2] : memref<8x32xf32, #tpu.memory_space<vmem>>, vector<8x32xf32>
    %cst_3 = arith.constant 2.500000e-01 : f32
    %4 = vector.broadcast %cst_3 : f32 to vector<8x32xf32>
    %5 = arith.mulf %3, %4 : vector<8x32xf32>
    %cst_4 = arith.constant dense<0xFF800000> : vector<8xf32>
    %6 = vector.multi_reduction <maximumf>, %2, %cst_4 [1] : vector<8x32xf32> to vector<8xf32>
    %7 = vector.shape_cast %6 : vector<8xf32> to vector<8x1xf32>
    %8 = vector.broadcast %7 : vector<8x1xf32> to vector<8x32xf32>
    %9 = arith.subf %2, %8 : vector<8x32xf32>
    %cst_5 = arith.constant dense<0xFF800000> : vector<8xf32>
    %10 = vector.multi_reduction <maximumf>, %5, %cst_5 [1] : vector<8x32xf32> to vector<8xf32>
    %11 = vector.shape_cast %10 : vector<8xf32> to vector<8x1xf32>
    %12 = vector.broadcast %11 : vector<8x1xf32> to vector<8x32xf32>
    %13 = arith.subf %5, %12 : vector<8x32xf32>
    %14 = math.exp %9 : vector<8x32xf32>
    %cst_6 = arith.constant dense<0.000000e+00> : vector<8xf32>
    %15 = vector.multi_reduction <add>, %14, %cst_6 [1] : vector<8x32xf32> to vector<8xf32>
    %16 = vector.shape_cast %15 : vector<8xf32> to vector<8x1xf32>
    %17 = math.exp %13 : vector<8x32xf32>
    %cst_7 = arith.constant dense<0.000000e+00> : vector<8xf32>
    %18 = vector.multi_reduction <add>, %17, %cst_7 [1] : vector<8x32xf32> to vector<8xf32>
    %19 = vector.shape_cast %18 : vector<8xf32> to vector<8x1xf32>
    %20 = tpu.reciprocal %19 : vector<8x1xf32> -> vector<8x1xf32>
    %21 = vector.broadcast %20 : vector<8x1xf32> to vector<8x32xf32>
    %22 = arith.mulf %17, %21 : vector<8x32xf32>
    %23 = arith.subf %13, %9 : vector<8x32xf32>
    %24 = arith.mulf %22, %23 : vector<8x32xf32>
    %cst_8 = arith.constant dense<0.000000e+00> : vector<8xf32>
    %25 = vector.multi_reduction <add>, %24, %cst_8 [1] : vector<8x32xf32> to vector<8xf32>
    %26 = vector.shape_cast %25 : vector<8xf32> to vector<8x1xf32>
    %27 = math.log %16 : vector<8x1xf32>
    %28 = arith.addf %26, %27 : vector<8x1xf32>
    %29 = math.log %19 : vector<8x1xf32>
    %30 = arith.subf %28, %29 : vector<8x1xf32>
    %31 = vector.shape_cast %30 : vector<8x1xf32> to vector<1x8x1xf32>
    %cst_9 = arith.constant dense<0.000000e+00> : vector<1xf32>
    %32 = vector.multi_reduction <add>, %31, %cst_9 [1, 2] : vector<1x8x1xf32> to vector<1xf32>
    %33 = vector.shape_cast %32 : vector<1xf32> to vector<1x1x1xf32>
    %34 = vector.extract %33[0, 0, 0] : f32 from vector<1x1x1xf32>
    %cst_10 = arith.constant 2.000000e+00 : f32
    %35 = arith.mulf %34, %cst_10 : f32
    %36 = vector.broadcast %35 : f32 to vector<1x128xf32>
    %c0_11 = arith.constant 0 : index
    %c0_12 = arith.constant 0 : index
    %37 = vector.load %arg3[%c0_11, %c0_12] : memref<1x128xf32, #tpu.memory_space<vmem>>, vector<1x128xf32>
    tpu.vector_store %arg3[%c0_11, %c0_12], %36 {strides = array<i32>} : memref<1x128xf32, #tpu.memory_space<vmem>>, vector<1x128xf32>,
    return
  }
  func.func @transform_0(%arg0: i32) -> (i32, i32) {
    %c0_i32 = arith.constant 0 : i32
    %c0_i32_0 = arith.constant 0 : i32
    return %arg0, %c0_i32 : i32, i32
  }
  func.func @transform_1(%arg0: i32) -> (i32, i32) {
    %c0_i32 = arith.constant 0 : i32
    %c0_i32_0 = arith.constant 0 : i32
    return %arg0, %c0_i32 : i32, i32
  }
  func.func @transform_2(%arg0: i32) -> (i32, i32) {
    %c0_i32 = arith.constant 0 : i32
    %c0_i32_0 = arith.constant 0 : i32
    return %arg0, %c0_i32 : i32, i32
  }
}

</mosaic_0001>

<llo_original>
// kernel: tpu_custom_call.1
$region0: #{tpu_custom_call.1}
  #allocation0 [shape = 'u32[]', space=smem, size = 0x4, offset = 0x4, fixed_abs, tag = 'smem constant byte address 0x4 - core index']
  #allocation1 [shape = 'u32[72,128]{1,0:T(1,128)}', space=vmem, size = 0x9000, scoped, tag = 'internal scratch']
  %s0 = inlined_call_operand.hbm [shape: f32[8,32], index: 0, kind: input, shape index: {}]
  %s1 = inlined_call_operand.hbm [shape: f32[8,32], index: 1, kind: input, shape index: {}]
  %s2 = inlined_call_operand.hbm [shape: f32[1,128], index: 2, kind: output, shape index: {}]
  %s3 = sld [smem:[#allocation0]]
  $region26: #{tpu_custom_call.1} parent=0
    _
  %s5 = ssub.s32 1, %s3
  %s6 = scalar_select 0, %s5, %s3
  $region1: #{tpu_custom_call.1} parent=0
    #allocation2 [shape = 'u8[4096]{0}', space=vmem, size = 0x1000, scoped, tag = 'input window, operand 0, single buffered']
    #allocation3 [shape = 's32[1]{0}', space=sflag, size = 0x4, scoped, tag = 'scoped memory for tpu_custom_call.1']
    #allocation4 [shape = 's32[1]{0}', space=sflag, size = 0x4, scoped, tag = 'scoped memory for tpu_custom_call.1']
    #allocation5 [shape = 'u8[4096]{0}', space=vmem, size = 0x1000, scoped, tag = 'input window, operand 1, single buffered']
    #allocation6 [shape = 's32[1]{0}', space=sflag, size = 0x4, scoped, tag = 'scoped memory for tpu_custom_call.1']
    #allocation7 [shape = 'u8[512]{0}', space=vmem, size = 0x400, scoped, tag = 'output window, operand 0, single buffered']
    %7 = vsyncpa [#allocation3], 0
    %8 = vsyncpa [#allocation6], 0
    %9 = vsyncpa [#allocation4], 0
    // Predicated region
    $region2: #{tpu_custom_call.1} parent=1 // pred_check
      _
    $region3: #{tpu_custom_call.1} parent=1 // pred_check_branch
      %11 = sbr.rel (0) target = $region5
    $region4: #{tpu_custom_call.1} parent=1 // pred_region
      %13 = vsyncadd [#allocation3], 0
      %s15 = sshll.u32 %s0, 4
      %s16 = int_to_ptr.hbm [resolvable:$true] %s15
      %s17 = sshll.u32 [#allocation2], 4
      %s18 = int_to_ptr.vmem [resolvable:$true] %s17
      %20 = dma.hbm_to_vmem [thread:$0]  %s16, 128, %s18, [#allocation3]
    $region5: #{tpu_custom_call.1} parent=1 // pred_fallthru
      _
    // Predicated region
    $region6: #{tpu_custom_call.1} parent=1 // pred_check
      _
    $region7: #{tpu_custom_call.1} parent=1 // pred_check_branch
      %22 = sbr.rel (0) target = $region9
    $region8: #{tpu_custom_call.1} parent=1 // pred_region
      %24 = vsyncadd [#allocation6], 0
      %s26 = sshll.u32 %s1, 4
      %s27 = int_to_ptr.hbm [resolvable:$true] %s26
      %s28 = sshll.u32 [#allocation5], 4
      %s29 = int_to_ptr.vmem [resolvable:$true] %s28
      %31 = dma.hbm_to_vmem [thread:$0]  %s27, 128, %s29, [#allocation6]
    $region9: #{tpu_custom_call.1} parent=1 // pred_fallthru
      _
    // Predicated region
    $region10: #{tpu_custom_call.1} parent=1 // pred_check
      _
    $region11: #{tpu_custom_call.1} parent=1 // pred_check_branch
      %33 = sbr.rel (0) target = $region13
    $region12: #{tpu_custom_call.1} parent=1 // pred_region
      %35 = dma.done [#allocation3], 128
    $region13: #{tpu_custom_call.1} parent=1 // pred_fallthru
      _
    // Predicated region
    $region14: #{tpu_custom_call.1} parent=1 // pred_check
      _
    $region15: #{tpu_custom_call.1} parent=1 // pred_check_branch
      %37 = sbr.rel (0) target = $region17
    $region16: #{tpu_custom_call.1} parent=1 // pred_region
      %39 = dma.done [#allocation6], 128
    $region17: #{tpu_custom_call.1} parent=1 // pred_fallthru
      _
    %v40 = vld [vmem:[#allocation2] sm:$0xff]
    %v41 = vmul.f32 %v40, 0.25
    %v42 = vld [vmem:[#allocation5] sm:$0xff]
    %v43 = vmul.f32 %v42, 0.25
    %vm44 = vcmask 261120
    %v45 = vsel %vm44, %v41, -inf
    %46 = vmax.xlane.f32.xlu0 %v45
    %v47 = vpop.xlane.xlu0 %46
    %v48 = vsub.f32 %v41, %v47
    %v49 = vsel %vm44, %v43, -inf
    %50 = vmax.xlane.f32.xlu0 %v49
    %v51 = vpop.xlane.xlu0 %50
    %v52 = vsub.f32 %v43, %v51
    %v53 = vmul.f32 %v48, 1.442695
    %v54 = vpow.pop %v53
    %v55 = vsel %vm44, %v54, 0.0
    %56 = vadd.xlane.f32.xlu0 %v55
    %v57 = vpop.xlane.xlu0 %56
    %v58 = vmul.f32 %v52, 1.442695
    %v59 = vpow.pop %v58
    %v60 = vsel %vm44, %v59, 0.0
    %61 = vadd.xlane.f32.xlu0 %v60
    %v62 = vpop.xlane.xlu0 %61
    %v63 = vrcp.pop %v62
    %v64 = vmul.f32 %v62, %v63
    %v65 = vsub.f32 1.0, %v64
    %v66 = vmul.f32 %v63, %v65
    %v67 = vadd.f32 %v63, %v66
    %vm68 = vweird.f32 %v62
    %vm69 = vweird.f32 %v63
    %vm70 = vmor %vm68, %vm69
    %v71 = vsel %vm70, %v63, %v67
    %v72 = vand.u32 2147483647, %v62
    %vm73 = vcmp.eq.f32.partialorder %v72, 8.507059e+37
    %v74 = vand.u32 %v62, 2147483648
    %v75 = vor.u32 1.1754944e-38, %v74
    %v76 = vsel %vm73, %v75, %v71
    %v77 = vmul.f32 %v59, %v76
    %v78 = vsub.f32 %v52, %v48
    %v79 = vmul.f32 %v77, %v78
    %v80 = vsel %vm44, %v79, 0.0
    %81 = vadd.xlane.f32.xlu0 %v80
    %v82 = vpop.xlane.xlu0 %81
    %v83 = vlog2.pop %v57
    %v84 = vmul.f32 %v83, 0.6931472
    %v85 = vadd.f32 %v82, %v84
    %v86 = vlog2.pop %v62
    %v87 = vmul.f32 %v86, 0.6931472
    %v88 = vsub.f32 %v85, %v87
    %vm89 = vcmask 7168
    %v90 = vsel %vm89, %v88, 0.0
    %91 = vadd.xlane.f32.xlu0 %v90
    %v92 = vpop.xlane.xlu0 %91
    %v93 = vrot.slane %v92, 4
    %v94 = vadd.f32 %v92, %v93
    %v95 = vrot.slane %v94, 2
    %v96 = vadd.f32 %v94, %v95
    %v97 = vrot.slane %v96, 1
    %v98 = vadd.f32 %v96, %v97
    %s99 = vtos %v98
    %s100 = smul.f32 %s99, 2.0
    %v101 = vstv %s100
    %102 = vst [vmem:[#allocation7] sm:$0x1] %v101
    // Predicated region
    $region18: #{tpu_custom_call.1} parent=1 // pred_check
      _
    $region19: #{tpu_custom_call.1} parent=1 // pred_check_branch
      %104 = sbr.rel (0) target = $region21
    $region20: #{tpu_custom_call.1} parent=1 // pred_region
      %106 = vsyncadd [#allocation4], 0
      %s108 = sshll.u32 [#allocation7], 4
      %s109 = int_to_ptr.vmem [resolvable:$true] %s108
      %s110 = sshll.u32 %s2, 4
      %s111 = int_to_ptr.hbm [resolvable:$true] %s110
      %113 = dma.vmem_to_hbm [thread:$0]  %s109, 16, %s111, [#allocation4]
    $region21: #{tpu_custom_call.1} parent=1 // pred_fallthru
      _
    // Predicated region
    $region22: #{tpu_custom_call.1} parent=1 // pred_check
      _
    $region23: #{tpu_custom_call.1} parent=1 // pred_check_branch
      %115 = sbr.rel (0) target = $region25
    $region24: #{tpu_custom_call.1} parent=1 // pred_region
      %117 = dma.done [#allocation4], 16
    $region25: #{tpu_custom_call.1} parent=1 // pred_fallthru
      _
    %118 = vsyncpa [#allocation3], 1
    %119 = vsyncpa [#allocation6], 1
    %120 = vsyncpa [#allocation4], 1

</llo_original>
